<compile_context>
chip_gen: v5e
topology: v5e:2x2
jax: 0.10.0
libtpu: 0.0.40
codegen_flags: <defaults>
</compile_context>

<pallas_src>
import jax
import jax.numpy as jnp
from jax.experimental import pallas as pl
from jax.experimental.pallas import tpu as pltpu

_EPS = 1e-5  # nn.BatchNorm2d default eps


# --------------------------------------------------------------------------- budgets
def _vmem_budget():
    """(vmem_limit_bytes, per-grid-step target bytes), generation-aware.

    128 MiB parts (v5e/v6e): limit 64 MiB, ~12.8 MiB per step.
    64 MiB parts (v7x):      limit 32 MiB, ~6.4 MiB per step."""
    try:
        cap = int(pltpu.get_tpu_info().vmem_capacity_bytes)
    except Exception:  # no TPU info available -> conservative (v7x-sized) budget
        cap = 64 * 1024 * 1024
    return cap // 2, cap // 10


def _pick_flat_block(ft, per_elem_bytes, target_bytes, min_steps):
    """Largest lane-dense chunk of the flattened F*T axis that divides F*T, is a
    multiple of 128 (or the full axis), fits the per-step VMEM target (double-buffered
    blocks + in-kernel f32 temporaries), and leaves >= min_steps grid steps."""
    cap = max(1, target_bytes // per_elem_bytes)
    if min_steps > 1:
        cap = min(cap, max(1, ft // min_steps))
    if ft <= cap:
        return ft
    cands = [d for d in range(128, ft, 128) if ft % d == 0]
    fit = [d for d in cands if d <= cap]
    if fit:
        return max(fit)
    if cands:  # nothing fits the target: smallest legal lane-dense tile, never silently F*T
        return min(cands)
    return ft  # awkward F*T with no 128-multiple divisor: single full chunk


def _pick_f_block(f, t, cin, cout, target_bytes, min_steps):
    """F-row tile for the NCHW pass-2 path.  per_row counts the double-buffered x/out
    blocks *and* the in-kernel f32 temporaries (x upcast, per-channel row, z)."""
    per_row = (3 * cin + 3 * cout + 2) * t * 4
    cap = max(1, target_bytes // per_row)
    if min_steps > 1:
        cap = min(cap, max(1, f // min_steps))
    cands = [d for d in range(8, f + 1, 8) if f % d == 0]
    if not cands:          # F not a multiple of 8: the block must be the full F
        return f
    fit = [d for d in cands if d <= cap]
    if fit:
        return max(fit)
    return min(cands)      # nothing fits: smallest legal tile, no silent overshoot to F


# --------------------------------------------------------------------------- kernels
def _stats_kernel(x_ref, mom_ref):
    # x_ref:   VMEM [1, Cin, 1, L]    lane-dense chunk of the flattened (F, T) axis
    # mom_ref: VMEM [1, 1, 1, NMOM]   [ sum(x_i) for i ] ++ [ sum(x_i*x_j) for i<=j ]
    # Full-T moments; the wrapper subtracts the last-time-step column's contribution.
    cin = x_ref.shape[1]
    x = x_ref[0].astype(jnp.float32)                 # [Cin, 1, L]
    cols = []
    for i in range(cin):
        cols.append(jnp.sum(x[i], keepdims=True))    # (1, 1)
    for i in range(cin):
        for j in range(i, cin):
            cols.append(jnp.sum(x[i] * x[j], keepdims=True))
    mom_ref[0, 0] = jnp.concatenate(cols, axis=1)    # (1, NMOM)


def _norm_flat_kernel(ws_ref, shift_ref, x_ref, o_ref):
    # ws_ref:    SMEM [Cout, Cin]   (BN scale already folded into the conv weights)
    # shift_ref: SMEM [Cout]        (beta - mean_y * scale)
    # x_ref:     VMEM [1, Cin, 1, L]   lane-dense
    # o_ref:     VMEM [1, Cout, 1, L]  full-T positions; wrapper drops t == T-1
    cin = x_ref.shape[1]
    cout = o_ref.shape[1]
    x = x_ref[0].astype(jnp.float32)                 # [Cin, 1, L]
    for co in range(cout):
        acc = ws_ref[co, 0] * x[0]
        for ci in range(1, cin):
            acc = acc + ws_ref[co, ci] * x[ci]
        z = acc + shift_ref[co]
        # ELU(alpha=1): z if z > 0 else exp(z) - 1  (expm1 runs on the EUP slot)
        o_ref[0, co] = jnp.where(z > 0, z, jnp.expm1(z)).astype(o_ref.dtype)


def _norm_nchw_kernel(ws_ref, shift_ref, x_ref, o_ref):
    # x_ref: VMEM [1, Cin, F_blk, T]; o_ref: VMEM [1, Cout, F_blk, T-1]
    cin = x_ref.shape[1]
    cout = o_ref.shape[1]
    tm1 = o_ref.shape[3]
    # No pre-slice of x: compute on the full, lane-aligned T; only the store is narrow.
    x = x_ref[0].astype(jnp.float32)                 # [Cin, F_blk, T]
    for co in range(cout):
        acc = ws_ref[co, 0] * x[0]
        for ci in range(1, cin):
            acc = acc + ws_ref[co, ci] * x[ci]
        z = acc + shift_ref[co]
        z = jnp.where(z > 0, z, jnp.expm1(z))
        o_ref[0, co] = z[:, :tm1].astype(o_ref.dtype)


# --------------------------------------------------------------------------- wrapper
def conv_block2(x, conv_w, conv_b, bn_gamma, bn_beta, *,
                lane_dense=None, flat_block=None, f_block=None):
    """x: [B, Cin, F, T] (NCHW). Returns [B, Cout, F, T-1] (NCHW), float32.

    Matches the PyTorch module: Conv2d(1x1) -> drop last time step -> BatchNorm2d
    (training-mode batch stats, biased variance, eps=1e-5) -> ELU.
    `conv_b` is accepted for interface parity but unused: the conv bias is exactly
    cancelled by the BN batch-mean subtraction (and does not affect the variance)."""
    del conv_b
    B, Cin, F, T = x.shape
    Cout = conv_w.shape[0]
    Tm1 = T - 1
    assert T >= 2, "need at least 2 time steps"

    npairs = (Cin * (Cin + 1)) // 2
    nmom = Cin + npairs
    w = conv_w.reshape(Cout, Cin).astype(jnp.float32)

    if lane_dense is None:
        lane_dense = T < 128          # small T: flattened lane axis, per the review

    vmem_limit, target_bytes = _vmem_budget()
    min_steps = 1 if B >= 2 else 2    # keep >= 2 parallel grid steps for v7x megacore
    per_elem = (3 * Cin + 3 * Cout + 2) * 4
    FT = F * T

    if flat_block is None:
        flat_block = _pick_flat_block(FT, per_elem, target_bytes, min_steps)
    assert FT % flat_block == 0, (FT, flat_block)
    n_l = FT // flat_block

    smem = pl.BlockSpec(memory_space=pltpu.MemorySpace.SMEM)
    cparams = pltpu.CompilerParams(dimension_semantics=("parallel", "parallel"),
                                   vmem_limit_bytes=vmem_limit)
    x_bytes = int(x.size) * x.dtype.itemsize

    xf = x.reshape(B, Cin, 1, FT)     # contiguous NCHW -> flat view (free in XLA)
    xf_spec = pl.BlockSpec((1, Cin, 1, flat_block), lambda b, li: (b, 0, 0, li))

    # ---- pass 1: lane-dense per-chunk input moments (no W, no mask, no y) ----
    parts = pl.pallas_call(
        _stats_kernel,
        out_shape=jax.ShapeDtypeStruct((B, n_l, 1, nmom), jnp.float32),
        grid=(B, n_l),
        in_specs=[xf_spec],
        out_specs=pl.BlockSpec((1, 1, 1, nmom), lambda b, li: (b, li, 0, 0)),
        compiler_params=cparams,
        cost_estimate=pl.CostEstimate(
            flops=B * FT * (npairs + nmom),
            transcendentals=0,
            bytes_accessed=x_bytes + B * n_l * nmom * 4),
    )(xf)

    # ---- tiny Cin/Cout-sized BN math on the moments (plain JAX) ----
    mom = jnp.sum(parts, axis=(0, 1, 2))              # [nmom]
    # The module's statistics exclude the last time step: subtract its column moments.
    xl = x[:, :, :, T - 1].astype(jnp.float32)        # [B, Cin, F]
    last_sum = jnp.sum(xl, axis=(0, 2))               # [Cin]
    last_xx = jnp.einsum("bif,bjf->ij", xl, xl)       # [Cin, Cin]

    n = B * F * Tm1
    sum_x = mom[:Cin] - last_sum
    pair = {}
    k = Cin
    for i in range(Cin):
        for j in range(i, Cin):
            pair[(i, j)] = mom[k]
            k += 1
    sxx = jnp.stack([jnp.stack([pair[(min(i, j), max(i, j))] for j in range(Cin)])
                     for i in range(Cin)]) - last_xx  # [Cin, Cin], valid positions only

    mean_x = sum_x / n                                # [Cin]
    exx = sxx / n                                     # [Cin, Cin]
    mean_y = w @ mean_x                               # [Cout]  (bias cancelled by BN)
    eyy = jnp.einsum("oi,ij,oj->o", w, exx, w)        # diag(W E[xx^T] W^T), [Cout]
    # TODO(synk): E[y^2] - mean^2 in f32 can cancel for very large B*F*T or
    # |mean| >> std; a shifted / centered accumulation would be preferable there.
    var = jnp.maximum(eyy - mean_y * mean_y, 0.0)     # biased (train-mode) variance
    scale = bn_gamma.astype(jnp.float32) * jax.lax.rsqrt(var + _EPS)
    shift = bn_beta.astype(jnp.float32) - mean_y * scale
    w_scaled = w * scale[:, None]                     # fold BN scale into the conv

    # ---- pass 2: conv with folded weights + shift + ELU ----
    if lane_dense:
        outf = pl.pallas_call(
            _norm_flat_kernel,
            out_shape=jax.ShapeDtypeStruct((B, Cout, 1, FT), jnp.float32),
            grid=(B, n_l),
            in_specs=[smem, smem, xf_spec],
            out_specs=pl.BlockSpec((1, Cout, 1, flat_block), lambda b, li: (b, 0, 0, li)),
            compiler_params=cparams,
            cost_estimate=pl.CostEstimate(
                flops=2 * B * FT * Cin * Cout + 3 * B * FT * Cout,
                transcendentals=B * FT * Cout,
                bytes_accessed=x_bytes + B * Cout * FT * 4),
        )(w_scaled, shift, xf)
        # Drop the t == T-1 column (one strided XLA copy).
        # TODO(synk): folding this slice into the kernel would need a lane compaction
        # (remove every T-th lane); only worth revisiting for mid-range T.
        out = outf.reshape(B, Cout, F, T)[:, :, :, :Tm1]
    else:
        if f_block is None:
            f_block = _pick_f_block(F, T, Cin, Cout, target_bytes, min_steps)
        assert F % f_block == 0 and (f_block % 8 == 0 or f_block == F), (F, f_block)
        n_f = F // f_block
        x_spec = pl.BlockSpec((1, Cin, f_block, T), lambda b, fi: (b, 0, fi, 0))
        out = pl.pallas_call(
            _norm_nchw_kernel,
            out_shape=jax.ShapeDtypeStruct((B, Cout, F, Tm1), jnp.float32),
            grid=(B, n_f),
            in_specs=[smem, smem, x_spec],
            out_specs=pl.BlockSpec((1, Cout, f_block, Tm1), lambda b, fi: (b, 0, fi, 0)),
            compiler_params=cparams,
            cost_estimate=pl.CostEstimate(
                flops=2 * B * F * Tm1 * Cin * Cout + 3 * B * F * Tm1 * Cout,
                transcendentals=B * F * Tm1 * Cout,
                bytes_accessed=x_bytes + B * Cout * F * Tm1 * 4),
        )(w_scaled, shift, x)
    return out


# --------------------------------------------------------------------------- reference
def _reference(x, conv_w, conv_b, bn_gamma, bn_beta):
    """Pure-JAX reference matching the PyTorch forward (train-mode BN, with bias)."""
    y = jnp.einsum("bcft,oc->boft", x, conv_w.reshape(conv_w.shape[0], conv_w.shape[1]))
    y = y + conv_b[None, :, None, None]
    y = y[:, :, :, :-1]
    mean = jnp.mean(y, axis=(0, 2, 3), keepdims=True)
    var = jnp.mean((y - mean) ** 2, axis=(0, 2, 3), keepdims=True)
    y = (y - mean) / jnp.sqrt(var + _EPS)
    y = y * bn_gamma[None, :, None, None] + bn_beta[None, :, None, None]
    return jnp.where(y > 0, y, jnp.expm1(y))


if __name__ == "__main__":
    B, Cin, Cout, F, T = 2, 4, 8, 16, 16

    key = jax.random.PRNGKey(0)
    kx, kw, kb, kg, kbeta = jax.random.split(key, 5)

    x = jax.random.normal(kx, (B, Cin, F, T), dtype=jnp.float32)

    # Conv2d(kernel_size=(1,1)) params: weight [Cout, Cin, 1, 1], bias [Cout]
    fan_in = Cin * 1 * 1
    bound = 1.0 / (fan_in ** 0.5)
    conv_w = jax.random.uniform(kw, (Cout, Cin, 1, 1), minval=-bound, maxval=bound,
                                dtype=jnp.float32)
    conv_b = jax.random.uniform(kb, (Cout,), minval=-bound, maxval=bound,
                                dtype=jnp.float32)
    # Non-trivial BN affine params to exercise the scale/shift folding.
    bn_gamma = 1.0 + 0.1 * jax.random.normal(kg, (Cout,), dtype=jnp.float32)
    bn_beta = 0.1 * jax.random.normal(kbeta, (Cout,), dtype=jnp.float32)

    ref = _reference(x, conv_w, conv_b, bn_gamma, bn_beta)

    # Lane-dense (flattened) path: the default for small T (T=16 here).
    out = conv_block2(x, conv_w, conv_b, bn_gamma, bn_beta)
    jax.block_until_ready(out)
    assert out.shape == (B, Cout, F, T - 1), out.shape
    err = float(jnp.max(jnp.abs(out - ref)))
    assert jnp.allclose(out, ref, atol=1e-4, rtol=1e-4), err

    # NCHW-tiled path (used for large T); force f_block=8 to exercise a (2, 2) grid.
    out2 = conv_block2(x, conv_w, conv_b, bn_gamma, bn_beta, lane_dense=False, f_block=8)
    jax.block_until_ready(out2)
    err2 = float(jnp.max(jnp.abs(out2 - ref)))
    assert jnp.allclose(out2, ref, atol=1e-4, rtol=1e-4), err2

    print("KERNEL_OK")
</pallas_src>

<mosaic_0001>
module attributes {stable_mosaic.version = 11 : i64} {
  func.func @_stats_kernel(%arg0: i32, %arg1: i32, %arg2: memref<1x4x1x256xf32, #tpu.memory_space<vmem>>, %arg3: memref<1x1x1x14xf32, #tpu.memory_space<vmem>>) attributes {dimension_semantics = [#tpu.dimension_semantics<parallel>, #tpu.dimension_semantics<parallel>], iteration_bounds = array<i64: 2, 1>, scalar_prefetch = 0 : i64, scratch_operands = 0 : i64, tpu.core_type = #tpu.core_type<tc>, window_params = [{transform_indices = @transform_0, window_bounds = array<i64: 1, 4, 1, 256>}, {transform_indices = @transform_1, window_bounds = array<i64: 1, 1, 1, 14>}]} {
    %c0 = arith.constant 0 : index
    %c0_0 = arith.constant 0 : index
    %c0_1 = arith.constant 0 : index
    %c0_2 = arith.constant 0 : index
    %0 = vector.load %arg2[%c0, %c0_0, %c0_1, %c0_2] : memref<1x4x1x256xf32, #tpu.memory_space<vmem>>, vector<1x4x1x256xf32>
    %1 = vector.shape_cast %0 : vector<1x4x1x256xf32> to vector<4x1x256xf32>
    %2 = vector.extract_strided_slice %1 {offsets = [0, 0, 0], sizes = [1, 1, 256], strides = [1, 1, 1]} : vector<4x1x256xf32> to vector<1x1x256xf32>
    %3 = vector.shape_cast %2 : vector<1x1x256xf32> to vector<1x256xf32>
    %4 = vector.shape_cast %3 : vector<1x256xf32> to vector<1x1x256xf32>
    %cst = arith.constant dense<0.000000e+00> : vector<1xf32>
    %5 = vector.multi_reduction <add>, %4, %cst [1, 2] : vector<1x1x256xf32> to vector<1xf32>
    %6 = vector.shape_cast %5 : vector<1xf32> to vector<1x1x1xf32>
    %7 = vector.extract %6[0, 0, 0] : f32 from vector<1x1x1xf32>
    %8 = vector.broadcast %7 : f32 to vector<1x1xf32>
    %9 = vector.extract_strided_slice %1 {offsets = [1, 0, 0], sizes = [1, 1, 256], strides = [1, 1, 1]} : vector<4x1x256xf32> to vector<1x1x256xf32>
    %10 = vector.shape_cast %9 : vector<1x1x256xf32> to vector<1x256xf32>
    %11 = vector.shape_cast %10 : vector<1x256xf32> to vector<1x1x256xf32>
    %cst_3 = arith.constant dense<0.000000e+00> : vector<1xf32>
    %12 = vector.multi_reduction <add>, %11, %cst_3 [1, 2] : vector<1x1x256xf32> to vector<1xf32>
    %13 = vector.shape_cast %12 : vector<1xf32> to vector<1x1x1xf32>
    %14 = vector.extract %13[0, 0, 0] : f32 from vector<1x1x1xf32>
    %15 = vector.broadcast %14 : f32 to vector<1x1xf32>
    %16 = vector.extract_strided_slice %1 {offsets = [2, 0, 0], sizes = [1, 1, 256], strides = [1, 1, 1]} : vector<4x1x256xf32> to vector<1x1x256xf32>
    %17 = vector.shape_cast %16 : vector<1x1x256xf32> to vector<1x256xf32>
    %18 = vector.shape_cast %17 : vector<1x256xf32> to vector<1x1x256xf32>
    %cst_4 = arith.constant dense<0.000000e+00> : vector<1xf32>
    %19 = vector.multi_reduction <add>, %18, %cst_4 [1, 2] : vector<1x1x256xf32> to vector<1xf32>
    %20 = vector.shape_cast %19 : vector<1xf32> to vector<1x1x1xf32>
    %21 = vector.extract %20[0, 0, 0] : f32 from vector<1x1x1xf32>
    %22 = vector.broadcast %21 : f32 to vector<1x1xf32>
    %23 = vector.extract_strided_slice %1 {offsets = [3, 0, 0], sizes = [1, 1, 256], strides = [1, 1, 1]} : vector<4x1x256xf32> to vector<1x1x256xf32>
    %24 = vector.shape_cast %23 : vector<1x1x256xf32> to vector<1x256xf32>
    %25 = vector.shape_cast %24 : vector<1x256xf32> to vector<1x1x256xf32>
    %cst_5 = arith.constant dense<0.000000e+00> : vector<1xf32>
    %26 = vector.multi_reduction <add>, %25, %cst_5 [1, 2] : vector<1x1x256xf32> to vector<1xf32>
    %27 = vector.shape_cast %26 : vector<1xf32> to vector<1x1x1xf32>
    %28 = vector.extract %27[0, 0, 0] : f32 from vector<1x1x1xf32>
    %29 = vector.broadcast %28 : f32 to vector<1x1xf32>
    %30 = vector.extract_strided_slice %1 {offsets = [0, 0, 0], sizes = [1, 1, 256], strides = [1, 1, 1]} : vector<4x1x256xf32> to vector<1x1x256xf32>
    %31 = vector.shape_cast %30 : vector<1x1x256xf32> to vector<1x256xf32>
    %32 = vector.extract_strided_slice %1 {offsets = [0, 0, 0], sizes = [1, 1, 256], strides = [1, 1, 1]} : vector<4x1x256xf32> to vector<1x1x256xf32>
    %33 = vector.shape_cast %32 : vector<1x1x256xf32> to vector<1x256xf32>
    %34 = arith.mulf %31, %33 : vector<1x256xf32>
    %35 = vector.shape_cast %34 : vector<1x256xf32> to vector<1x1x256xf32>
    %cst_6 = arith.constant dense<0.000000e+00> : vector<1xf32>
    %36 = vector.multi_reduction <add>, %35, %cst_6 [1, 2] : vector<1x1x256xf32> to vector<1xf32>
    %37 = vector.shape_cast %36 : vector<1xf32> to vector<1x1x1xf32>
    %38 = vector.extract %37[0, 0, 0] : f32 from vector<1x1x1xf32>
    %39 = vector.broadcast %38 : f32 to vector<1x1xf32>
    %40 = vector.extract_strided_slice %1 {offsets = [0, 0, 0], sizes = [1, 1, 256], strides = [1, 1, 1]} : vector<4x1x256xf32> to vector<1x1x256xf32>
    %41 = vector.shape_cast %40 : vector<1x1x256xf32> to vector<1x256xf32>
    %42 = vector.extract_strided_slice %1 {offsets = [1, 0, 0], sizes = [1, 1, 256], strides = [1, 1, 1]} : vector<4x1x256xf32> to vector<1x1x256xf32>
    %43 = vector.shape_cast %42 : vector<1x1x256xf32> to vector<1x256xf32>
    %44 = arith.mulf %41, %43 : vector<1x256xf32>
    %45 = vector.shape_cast %44 : vector<1x256xf32> to vector<1x1x256xf32>
    %cst_7 = arith.constant dense<0.000000e+00> : vector<1xf32>
    %46 = vector.multi_reduction <add>, %45, %cst_7 [1, 2] : vector<1x1x256xf32> to vector<1xf32>
    %47 = vector.shape_cast %46 : vector<1xf32> to vector<1x1x1xf32>
    %48 = vector.extract %47[0, 0, 0] : f32 from vector<1x1x1xf32>
    %49 = vector.broadcast %48 : f32 to vector<1x1xf32>
    %50 = vector.extract_strided_slice %1 {offsets = [0, 0, 0], sizes = [1, 1, 256], strides = [1, 1, 1]} : vector<4x1x256xf32> to vector<1x1x256xf32>
    %51 = vector.shape_cast %50 : vector<1x1x256xf32> to vector<1x256xf32>
    %52 = vector.extract_strided_slice %1 {offsets = [2, 0, 0], sizes = [1, 1, 256], strides = [1, 1, 1]} : vector<4x1x256xf32> to vector<1x1x256xf32>
    %53 = vector.shape_cast %52 : vector<1x1x256xf32> to vector<1x256xf32>
    %54 = arith.mulf %51, %53 : vector<1x256xf32>
    %55 = vector.shape_cast %54 : vector<1x256xf32> to vector<1x1x256xf32>
    %cst_8 = arith.constant dense<0.000000e+00> : vector<1xf32>
    %56 = vector.multi_reduction <add>, %55, %cst_8 [1, 2] : vector<1x1x256xf32> to vector<1xf32>
    %57 = vector.shape_cast %56 : vector<1xf32> to vector<1x1x1xf32>
    %58 = vector.extract %57[0, 0, 0] : f32 from vector<1x1x1xf32>
    %59 = vector.broadcast %58 : f32 to vector<1x1xf32>
    %60 = vector.extract_strided_slice %1 {offsets = [0, 0, 0], sizes = [1, 1, 256], strides = [1, 1, 1]} : vector<4x1x256xf32> to vector<1x1x256xf32>
    %61 = vector.shape_cast %60 : vector<1x1x256xf32> to vector<1x256xf32>
    %62 = vector.extract_strided_slice %1 {offsets = [3, 0, 0], sizes = [1, 1, 256], strides = [1, 1, 1]} : vector<4x1x256xf32> to vector<1x1x256xf32>
    %63 = vector.shape_cast %62 : vector<1x1x256xf32> to vector<1x256xf32>
    %64 = arith.mulf %61, %63 : vector<1x256xf32>
    %65 = vector.shape_cast %64 : vector<1x256xf32> to vector<1x1x256xf32>
    %cst_9 = arith.constant dense<0.000000e+00> : vector<1xf32>
    %66 = vector.multi_reduction <add>, %65, %cst_9 [1, 2] : vector<1x1x256xf32> to vector<1xf32>
    %67 = vector.shape_cast %66 : vector<1xf32> to vector<1x1x1xf32>
    %68 = vector.extract %67[0, 0, 0] : f32 from vector<1x1x1xf32>
    %69 = vector.broadcast %68 : f32 to vector<1x1xf32>
    %70 = vector.extract_strided_slice %1 {offsets = [1, 0, 0], sizes = [1, 1, 256], strides = [1, 1, 1]} : vector<4x1x256xf32> to vector<1x1x256xf32>
    %71 = vector.shape_cast %70 : vector<1x1x256xf32> to vector<1x256xf32>
    %72 = vector.extract_strided_slice %1 {offsets = [1, 0, 0], sizes = [1, 1, 256], strides = [1, 1, 1]} : vector<4x1x256xf32> to vector<1x1x256xf32>
    %73 = vector.shape_cast %72 : vector<1x1x256xf32> to vector<1x256xf32>
    %74 = arith.mulf %71, %73 : vector<1x256xf32>
    %75 = vector.shape_cast %74 : vector<1x256xf32> to vector<1x1x256xf32>
    %cst_10 = arith.constant dense<0.000000e+00> : vector<1xf32>
    %76 = vector.multi_reduction <add>, %75, %cst_10 [1, 2] : vector<1x1x256xf32> to vector<1xf32>
    %77 = vector.shape_cast %76 : vector<1xf32> to vector<1x1x1xf32>
    %78 = vector.extract %77[0, 0, 0] : f32 from vector<1x1x1xf32>
    %79 = vector.broadcast %78 : f32 to vector<1x1xf32>
    %80 = vector.extract_strided_slice %1 {offsets = [1, 0, 0], sizes = [1, 1, 256], strides = [1, 1, 1]} : vector<4x1x256xf32> to vector<1x1x256xf32>
    %81 = vector.shape_cast %80 : vector<1x1x256xf32> to vector<1x256xf32>
    %82 = vector.extract_strided_slice %1 {offsets = [2, 0, 0], sizes = [1, 1, 256], strides = [1, 1, 1]} : vector<4x1x256xf32> to vector<1x1x256xf32>
    %83 = vector.shape_cast %82 : vector<1x1x256xf32> to vector<1x256xf32>
    %84 = arith.mulf %81, %83 : vector<1x256xf32>
    %85 = vector.shape_cast %84 : vector<1x256xf32> to vector<1x1x256xf32>
    %cst_11 = arith.constant dense<0.000000e+00> : vector<1xf32>
    %86 = vector.multi_reduction <add>, %85, %cst_11 [1, 2] : vector<1x1x256xf32> to vector<1xf32>
    %87 = vector.shape_cast %86 : vector<1xf32> to vector<1x1x1xf32>
    %88 = vector.extract %87[0, 0, 0] : f32 from vector<1x1x1xf32>
    %89 = vector.broadcast %88 : f32 to vector<1x1xf32>
    %90 = vector.extract_strided_slice %1 {offsets = [1, 0, 0], sizes = [1, 1, 256], strides = [1, 1, 1]} : vector<4x1x256xf32> to vector<1x1x256xf32>
    %91 = vector.shape_cast %90 : vector<1x1x256xf32> to vector<1x256xf32>
    %92 = vector.extract_strided_slice %1 {offsets = [3, 0, 0], sizes = [1, 1, 256], strides = [1, 1, 1]} : vector<4x1x256xf32> to vector<1x1x256xf32>
    %93 = vector.shape_cast %92 : vector<1x1x256xf32> to vector<1x256xf32>
    %94 = arith.mulf %91, %93 : vector<1x256xf32>
    %95 = vector.shape_cast %94 : vector<1x256xf32> to vector<1x1x256xf32>
    %cst_12 = arith.constant dense<0.000000e+00> : vector<1xf32>
    %96 = vector.multi_reduction <add>, %95, %cst_12 [1, 2] : vector<1x1x256xf32> to vector<1xf32>
    %97 = vector.shape_cast %96 : vector<1xf32> to vector<1x1x1xf32>
    %98 = vector.extract %97[0, 0, 0] : f32 from vector<1x1x1xf32>
    %99 = vector.broadcast %98 : f32 to vector<1x1xf32>
    %100 = vector.extract_strided_slice %1 {offsets = [2, 0, 0], sizes = [1, 1, 256], strides = [1, 1, 1]} : vector<4x1x256xf32> to vector<1x1x256xf32>
    %101 = vector.shape_cast %100 : vector<1x1x256xf32> to vector<1x256xf32>
    %102 = vector.extract_strided_slice %1 {offsets = [2, 0, 0], sizes = [1, 1, 256], strides = [1, 1, 1]} : vector<4x1x256xf32> to vector<1x1x256xf32>
    %103 = vector.shape_cast %102 : vector<1x1x256xf32> to vector<1x256xf32>
    %104 = arith.mulf %101, %103 : vector<1x256xf32>
    %105 = vector.shape_cast %104 : vector<1x256xf32> to vector<1x1x256xf32>
    %cst_13 = arith.constant dense<0.000000e+00> : vector<1xf32>
    %106 = vector.multi_reduction <add>, %105, %cst_13 [1, 2] : vector<1x1x256xf32> to vector<1xf32>
    %107 = vector.shape_cast %106 : vector<1xf32> to vector<1x1x1xf32>
    %108 = vector.extract %107[0, 0, 0] : f32 from vector<1x1x1xf32>
    %109 = vector.broadcast %108 : f32 to vector<1x1xf32>
    %110 = vector.extract_strided_slice %1 {offsets = [2, 0, 0], sizes = [1, 1, 256], strides = [1, 1, 1]} : vector<4x1x256xf32> to vector<1x1x256xf32>
    %111 = vector.shape_cast %110 : vector<1x1x256xf32> to vector<1x256xf32>
    %112 = vector.extract_strided_slice %1 {offsets = [3, 0, 0], sizes = [1, 1, 256], strides = [1, 1, 1]} : vector<4x1x256xf32> to vector<1x1x256xf32>
    %113 = vector.shape_cast %112 : vector<1x1x256xf32> to vector<1x256xf32>
    %114 = arith.mulf %111, %113 : vector<1x256xf32>
    %115 = vector.shape_cast %114 : vector<1x256xf32> to vector<1x1x256xf32>
    %cst_14 = arith.constant dense<0.000000e+00> : vector<1xf32>
    %116 = vector.multi_reduction <add>, %115, %cst_14 [1, 2] : vector<1x1x256xf32> to vector<1xf32>
    %117 = vector.shape_cast %116 : vector<1xf32> to vector<1x1x1xf32>
    %118 = vector.extract %117[0, 0, 0] : f32 from vector<1x1x1xf32>
    %119 = vector.broadcast %118 : f32 to vector<1x1xf32>
    %120 = vector.extract_strided_slice %1 {offsets = [3, 0, 0], sizes = [1, 1, 256], strides = [1, 1, 1]} : vector<4x1x256xf32> to vector<1x1x256xf32>
    %121 = vector.shape_cast %120 : vector<1x1x256xf32> to vector<1x256xf32>
    %122 = vector.extract_strided_slice %1 {offsets = [3, 0, 0], sizes = [1, 1, 256], strides = [1, 1, 1]} : vector<4x1x256xf32> to vector<1x1x256xf32>
    %123 = vector.shape_cast %122 : vector<1x1x256xf32> to vector<1x256xf32>
    %124 = arith.mulf %121, %123 : vector<1x256xf32>
    %125 = vector.shape_cast %124 : vector<1x256xf32> to vector<1x1x256xf32>
    %cst_15 = arith.constant dense<0.000000e+00> : vector<1xf32>
    %126 = vector.multi_reduction <add>, %125, %cst_15 [1, 2] : vector<1x1x256xf32> to vector<1xf32>
    %127 = vector.shape_cast %126 : vector<1xf32> to vector<1x1x1xf32>
    %128 = vector.extract %127[0, 0, 0] : f32 from vector<1x1x1xf32>
    %129 = vector.broadcast %128 : f32 to vector<1x1xf32>
    %130 = tpu.concatenate %8, %15, %22, %29, %39, %49, %59, %69, %79, %89, %99, %109, %119, %129 in 1 : vector<1x1xf32>, vector<1x1xf32>, vector<1x1xf32>, vector<1x1xf32>, vector<1x1xf32>, vector<1x1xf32>, vector<1x1xf32>, vector<1x1xf32>, vector<1x1xf32>, vector<1x1xf32>, vector<1x1xf32>, vector<1x1xf32>, vector<1x1xf32>, vector<1x1xf32> -> vector<1x14xf32>
    %c0_16 = arith.constant 0 : index
    %c0_17 = arith.constant 0 : index
    %c0_18 = arith.constant 0 : index
    %c0_19 = arith.constant 0 : index
    %131 = vector.load %arg3[%c0_16, %c0_17, %c0_18, %c0_19] : memref<1x1x1x14xf32, #tpu.memory_space<vmem>>, vector<1x1x1x14xf32>
    %132 = vector.shape_cast %131 : vector<1x1x1x14xf32> to vector<1x14xf32>
    %133 = vector.shape_cast %130 : vector<1x14xf32> to vector<1x1x1x14xf32>
    tpu.vector_store %arg3[%c0_16, %c0_17, %c0_18, %c0_19], %133 {strides = array<i32>} : memref<1x1x1x14xf32, #tpu.memory_space<vmem>>, vector<1x1x1x14xf32>,
    return
  }
  func.func @transform_0(%arg0: i32, %arg1: i32) -> (i32, i32, i32, i32) {
    %c0_i32 = arith.constant 0 : i32
    %c0_i32_0 = arith.constant 0 : i32
    %c0_i32_1 = arith.constant 0 : i32
    return %arg0, %c0_i32, %c0_i32_0, %arg1 : i32, i32, i32, i32
  }
  func.func @transform_1(%arg0: i32, %arg1: i32) -> (i32, i32, i32, i32) {
    %c0_i32 = arith.constant 0 : i32
    %c0_i32_0 = arith.constant 0 : i32
    %c0_i32_1 = arith.constant 0 : i32
    return %arg0, %arg1, %c0_i32, %c0_i32_0 : i32, i32, i32, i32
  }
}

</mosaic_0001>

<llo_original>
// kernel: tpu_custom_call.1
$region0: #{tpu_custom_call.1}
  #allocation0 [shape = 'u32[]', space=smem, size = 0x4, offset = 0x4, fixed_abs, tag = 'smem constant byte address 0x4 - core index']
  #allocation1 [shape = 'u32[72,128]{1,0:T(1,128)}', space=vmem, size = 0x9000, scoped, tag = 'internal scratch']
  %s0 = inlined_call_operand.hbm [shape: f32[2,4,1,256], index: 0, kind: input, shape index: {}]
  %s1 = inlined_call_operand.hbm [shape: f32[2,1,1,14], index: 1, kind: output, shape index: {}]
  %s2 = sld [smem:[#allocation0]]
  $region41: #{tpu_custom_call.1} parent=0
    _
  %s4 = ssub.s32 1, %s2
  %s5 = scalar_select 0, %s4, %s2
  $region1: #{tpu_custom_call.1} parent=0
    #allocation2 [shape = 'u8[8192]{0}', space=vmem, size = 0x2000, scoped, tag = 'input window, operand 0']
    #allocation3 [shape = 's32[2]{0}', space=sflag, size = 0x8, scoped, tag = 'scoped memory for tpu_custom_call.1']
    #allocation4 [shape = 's32[2]{0}', space=sflag, size = 0x8, scoped, tag = 'scoped memory for tpu_custom_call.1']
    #allocation5 [shape = 'u8[1024]{0}', space=vmem, size = 0x400, scoped, tag = 'output window, operand 0']
    %6 = vsyncpa [#allocation3], 0
    %s7 = scalar_lea.sflag [#allocation3], 1
    %8 = vsyncpa %s7, 0
    %9 = vsyncpa [#allocation4], 0
    %s10 = scalar_lea.sflag [#allocation4], 1
    %11 = vsyncpa %s10, 0
    loop: start=0, step=1, limit=4
    $region2: #{tpu_custom_call.1} parent=1 // loop_pre_header
      _
    $region3: #{tpu_custom_call.1} parent=1 // loop_header
      %s13 = sphi 0, %s17
      %p14 = scmp.ge.s32.totalorder %s13, 4
      %s20 = sphi 0, %s32
      %s21 = sphi 0, %s28
      %s22 = sphi 0, %s20
      %s23 = sphi 0, %s21
      %s24 = sphi 0, %s22
      %s25 = sphi 0, %s23
      %s37 = sphi 0, %s39
      %s40 = sphi 0, %s37
      %s41 = sphi 0, %s40
      %s57 = sphi 0, %s41
      %s65 = sphi 0, %s67
      %s68 = sphi 0, %s65
      %s69 = sphi 0, %s68
      %s85 = sphi 0, %s69
    $region4: #{tpu_custom_call.1} parent=1 // loop_header_branch
      %16 = sbr.rel (%p14) target = $region8
    $region5: #{tpu_custom_call.1} parent=1 // loop_body
      %s18 = ssub.s32 %s13, 1
      %s19 = ssub.s32 %s13, 2
      %s26 = sadd.s32 1, %s21
      %p27 = scmp.ge.s32.totalorder %s26, 1
      %s28 = scalar_select %p27, 0, %s26
      %s29 = sadd.s32 1, %s20
      %s30 = scalar_select %p27, %s29, %s20
      %p31 = scmp.ge.s32.totalorder %s30, 2
      %s32 = scalar_select %p31, 0, %s30
      %s33 = ssub.s32 %s20, %s32
      %s34 = ssub.s32 %s21, %s28
      %s35 = sor.u32 %s33, %s34
      %p36 = scmp.eq.s32.totalorder %s35, 0
      %s38 = sadd.s32 %s37, 1
      %s39 = scalar_select %p36, %s37, %s38
      %p42 = pneg %p36
      %p43 = scmp.eq.s32.totalorder %s13, 1
      %p44 = por %p42, %p43
      %p45 = scmp.ne.s32.totalorder %s37, %s40
      %p46 = scmp.eq.s32.totalorder %s13, 0
      %p47 = por %p45, %p46
      %p48 = scmp.ne.s32.totalorder %s37, %s40
      %p49 = scmp.eq.s32.totalorder %s18, 1
      %p50 = por %p48, %p49
      %p51 = scmp.ne.s32.totalorder %s40, %s41
      %p52 = scmp.eq.s32.totalorder %s18, 0
      %p53 = por %p51, %p52
      %p54 = scmp.ne.s32.totalorder %s40, %s41
      %p55 = scmp.eq.s32.totalorder %s19, 1
      %p56 = por %p54, %p55
      %p58 = scmp.ne.s32.totalorder %s41, %s57
      %p59 = scmp.eq.s32.totalorder %s19, 0
      %p60 = por %p58, %p59
      %s61 = ssub.s32 %s20, %s32
      %s62 = ssub.s32 %s21, %s28
      %s63 = sor.u32 %s61, %s62
      %p64 = scmp.eq.s32.totalorder %s63, 0
      %s66 = sadd.s32 %s65, 1
      %s67 = scalar_select %p64, %s65, %s66
      %p70 = pneg %p64
      %p71 = scmp.eq.s32.totalorder %s13, 1
      %p72 = por %p70, %p71
      %p73 = scmp.ne.s32.totalorder %s65, %s68
      %p74 = scmp.eq.s32.totalorder %s13, 0
      %p75 = por %p73, %p74
      %p76 = scmp.ne.s32.totalorder %s65, %s68
      %p77 = scmp.eq.s32.totalorder %s18, 1
      %p78 = por %p76, %p77
      %p79 = scmp.ne.s32.totalorder %s68, %s69
      %p80 = scmp.eq.s32.totalorder %s18, 0
      %p81 = por %p79, %p80
      %p82 = scmp.ne.s32.totalorder %s68, %s69
      %p83 = scmp.eq.s32.totalorder %s19, 1
      %p84 = por %p82, %p83
      %p86 = scmp.ne.s32.totalorder %s69, %s85
      %p87 = scmp.eq.s32.totalorder %s19, 0
      %p88 = por %p86, %p87
      %p89 = scmp.le.s32.totalorder 1, %s13
      %p90 = scmp.lt.s32.totalorder %s13, 3
      %p91 = pnand %p89, %p90
      %p92 = pneg %p91
      // Predicated region
      $region9: #{tpu_custom_call.1} parent=5 // pred_check
        _
      $region10: #{tpu_custom_call.1} parent=5 // pred_check_branch
        %94 = sbr.rel (%p91) target = $region12
      $region11: #{tpu_custom_call.1} parent=5 // pred_region
        %s95 = ssub.s32 %s13, 1
      $region12: #{tpu_custom_call.1} parent=5 // pred_fallthru
        _
      %p96 = scmp.lt.s32.totalorder %s13, 2
      // Predicated region
      $region13: #{tpu_custom_call.1} parent=5 // pred_check
        %p97 = pneg %p96
      $region14: #{tpu_custom_call.1} parent=5 // pred_check_branch
        %99 = sbr.rel (%p97) target = $region16
      $region15: #{tpu_custom_call.1} parent=5 // pred_region
        // Predicated region
        $region17: #{tpu_custom_call.1} parent=15 // pred_check
          %p100 = pneg %p47
        $region18: #{tpu_custom_call.1} parent=15 // pred_check_branch
          %102 = sbr.rel (%p100) target = $region20
        $region19: #{tpu_custom_call.1} parent=15 // pred_region
          %s103 = sand.u32 %s37, 1
          %s104 = scalar_lea.sflag [#allocation3], %s103
          %s105 = sand.u32 %s37, 1
          %s106 = smul.addr %s105, 8
          %s107 = scalar_lea.vmem [#allocation2], %s106
          %s108 = smul.u32 2, %s21
          %110 = vsyncadd %s104, 0
          %s111 = smul.addr %s20, 8
          %s112 = sadd.s32 %s108, %s111
          %s113 = scalar_lea.hbm %s0, %s112
          %s114 = sshll.u32 %s113, 4
          %s115 = int_to_ptr.hbm [resolvable:$true] %s114
          %s116 = sshll.u32 %s107, 4
          %s117 = int_to_ptr.vmem [resolvable:$true] %s116
          %122 = dma.hbm_to_vmem [thread:$0]  %s115, 128, %s117, %s104, 32, 32, 2
        $region20: #{tpu_custom_call.1} parent=15 // pred_fallthru
          _
      $region16: #{tpu_custom_call.1} parent=5 // pred_fallthru
        _
      %p123 = scmp.le.s32.totalorder 1, %s13
      %p124 = scmp.lt.s32.totalorder %s13, 3
      %p125 = pnand %p123, %p124
      %p126 = pneg %p125
      // Predicated region
      $region21: #{tpu_custom_call.1} parent=5 // pred_check
        _
      $region22: #{tpu_custom_call.1} parent=5 // pred_check_branch
        %128 = sbr.rel (%p125) target = $region24
      $region23: #{tpu_custom_call.1} parent=5 // pred_region
        %s129 = ssub.s32 %s13, 1
        %s130 = sand.u32 %s40, 1
        %s131 = scalar_lea.sflag [#allocation3], %s130
        %s132 = sand.u32 %s40, 1
        %s133 = smul.addr %s132, 8
        %s134 = scalar_lea.vmem [#allocation2], %s133
        // Predicated region
        $region25: #{tpu_custom_call.1} parent=23 // pred_check
          %p135 = pneg %p53
        $region26: #{tpu_custom_call.1} parent=23 // pred_check_branch
          %137 = sbr.rel (%p135) target = $region28
        $region27: #{tpu_custom_call.1} parent=23 // pred_region
          %139 = dma.done %s131, 128
        $region28: #{tpu_custom_call.1} parent=23 // pred_fallthru
          _
        %s140 = sand.u32 %s40, 1
        %s141 = scalar_lea.sflag [#allocation3], %s140
        %s142 = sand.u32 %s40, 1
        %s143 = smul.addr %s142, 8
        %s144 = scalar_lea.vmem [#allocation2], %s143
        %p145 = pneg %p53
        %p146 = pneg %p50
        %p147 = pneg %p81
        %p148 = pneg %p78
        %s149 = sand.u32 %s68, 1
        %s150 = scalar_lea.sflag [#allocation4], %s149
        %s151 = sand.u32 %s68, 1
        %s152 = scalar_lea.vmem [#allocation5], %s151
        %s153 = smul.u32 2, %s23
        %v154 = vld [vmem:[%s134] sm:$0x3]
        %v155 = vld [vmem:[%s134 + $0x2] sm:$0x3]
        %v156 = vld [vmem:[%s134 + $0x4] sm:$0x3]
        %v157 = vld [vmem:[%s134 + $0x6] sm:$0x3]
        %v159 = vperm.slane %v154, 0
        %v160 = vperm.slane %v154, 1
        %vm163 = vcmask 1040384
        %v164 = vsel %vm163, %v159, 0.0
        %v165 = vsel %vm163, %v160, 0.0
        %v166 = vadd.f32 %v164, %v165
        %167 = vadd.xlane.f32.xlu0 %v166
        %v168 = vpop.xlane.xlu0 %167
        %v169 = vrot.slane %v168, 4
        %v170 = vadd.f32 %v168, %v169
        %v171 = vrot.slane %v170, 2
        %v172 = vadd.f32 %v170, %v171
        %v173 = vrot.slane %v172, 1
        %v174 = vadd.f32 %v172, %v173
        %s175 = vtos %v174
        %v176 = vstv %s175
        %v178 = vperm.slane %v155, 0
        %v179 = vperm.slane %v155, 1
        %v182 = vsel %vm163, %v178, 0.0
        %v183 = vsel %vm163, %v179, 0.0
        %v184 = vadd.f32 %v182, %v183
        %185 = vadd.xlane.f32.xlu0 %v184
        %v186 = vpop.xlane.xlu0 %185
        %v187 = vrot.slane %v186, 4
        %v188 = vadd.f32 %v186, %v187
        %v189 = vrot.slane %v188, 2
        %v190 = vadd.f32 %v188, %v189
        %v191 = vrot.slane %v190, 1
        %v192 = vadd.f32 %v190, %v191
        %s193 = vtos %v192
        %v194 = vstv %s193
        %v196 = vperm.slane %v156, 0
        %v197 = vperm.slane %v156, 1
        %v200 = vsel %vm163, %v196, 0.0
        %v201 = vsel %vm163, %v197, 0.0
        %v202 = vadd.f32 %v200, %v201
        %203 = vadd.xlane.f32.xlu0 %v202
        %v204 = vpop.xlane.xlu0 %203
        %v205 = vrot.slane %v204, 4
        %v206 = vadd.f32 %v204, %v205
        %v207 = vrot.slane %v206, 2
        %v208 = vadd.f32 %v206, %v207
        %v209 = vrot.slane %v208, 1
        %v210 = vadd.f32 %v208, %v209
        %s211 = vtos %v210
        %v212 = vstv %s211
        %v214 = vperm.slane %v157, 0
        %v215 = vperm.slane %v157, 1
        %v218 = vsel %vm163, %v214, 0.0
        %v219 = vsel %vm163, %v215, 0.0
        %v220 = vadd.f32 %v218, %v219
        %221 = vadd.xlane.f32.xlu0 %v220
        %v222 = vpop.xlane.xlu0 %221
        %v223 = vrot.slane %v222, 4
        %v224 = vadd.f32 %v222, %v223
        %v225 = vrot.slane %v224, 2
        %v226 = vadd.f32 %v224, %v225
        %v227 = vrot.slane %v226, 1
        %v228 = vadd.f32 %v226, %v227
        %s229 = vtos %v228
        %v230 = vstv %s229
        %v231 = vmul.f32 %v154, %v154
        %v233 = vperm.slane %v231, 0
        %v234 = vperm.slane %v231, 1
        %v237 = vsel %vm163, %v233, 0.0
        %v238 = vsel %vm163, %v234, 0.0
        %v239 = vadd.f32 %v237, %v238
        %240 = vadd.xlane.f32.xlu0 %v239
        %v241 = vpop.xlane.xlu0 %240
        %v242 = vrot.slane %v241, 4
        %v243 = vadd.f32 %v241, %v242
        %v244 = vrot.slane %v243, 2
        %v245 = vadd.f32 %v243, %v244
        %v246 = vrot.slane %v245, 1
        %v247 = vadd.f32 %v245, %v246
        %s248 = vtos %v247
        %v249 = vstv %s248
        %v250 = vmul.f32 %v154, %v155
        %v252 = vperm.slane %v250, 0
        %v253 = vperm.slane %v250, 1
        %v256 = vsel %vm163, %v252, 0.0
        %v257 = vsel %vm163, %v253, 0.0
        %v258 = vadd.f32 %v256, %v257
        %259 = vadd.xlane.f32.xlu0 %v258
        %v260 = vpop.xlane.xlu0 %259
        %v261 = vrot.slane %v260, 4
        %v262 = vadd.f32 %v260, %v261
        %v263 = vrot.slane %v262, 2
        %v264 = vadd.f32 %v262, %v263
        %v265 = vrot.slane %v264, 1
        %v266 = vadd.f32 %v264, %v265
        %s267 = vtos %v266
        %v268 = vstv %s267
        %v269 = vmul.f32 %v154, %v156
        %v271 = vperm.slane %v269, 0
        %v272 = vperm.slane %v269, 1
        %v275 = vsel %vm163, %v271, 0.0
        %v276 = vsel %vm163, %v272, 0.0
        %v277 = vadd.f32 %v275, %v276
        %278 = vadd.xlane.f32.xlu0 %v277
        %v279 = vpop.xlane.xlu0 %278
        %v280 = vrot.slane %v279, 4
        %v281 = vadd.f32 %v279, %v280
        %v282 = vrot.slane %v281, 2
        %v283 = vadd.f32 %v281, %v282
        %v284 = vrot.slane %v283, 1
        %v285 = vadd.f32 %v283, %v284
        %s286 = vtos %v285
        %v287 = vstv %s286
        %v288 = vmul.f32 %v154, %v157
        %v290 = vperm.slane %v288, 0
        %v291 = vperm.slane %v288, 1
        %v294 = vsel %vm163, %v290, 0.0
        %v295 = vsel %vm163, %v291, 0.0
        %v296 = vadd.f32 %v294, %v295
        %297 = vadd.xlane.f32.xlu0 %v296
        %v298 = vpop.xlane.xlu0 %297
        %v299 = vrot.slane %v298, 4
        %v300 = vadd.f32 %v298, %v299
        %v301 = vrot.slane %v300, 2
        %v302 = vadd.f32 %v300, %v301
        %v303 = vrot.slane %v302, 1
        %v304 = vadd.f32 %v302, %v303
        %s305 = vtos %v304
        %v306 = vstv %s305
        %v307 = vmul.f32 %v155, %v155
        %v309 = vperm.slane %v307, 0
        %v310 = vperm.slane %v307, 1
        %v313 = vsel %vm163, %v309, 0.0
        %v314 = vsel %vm163, %v310, 0.0
        %v315 = vadd.f32 %v313, %v314
        %316 = vadd.xlane.f32.xlu0 %v315
        %v317 = vpop.xlane.xlu0 %316
        %v318 = vrot.slane %v317, 4
        %v319 = vadd.f32 %v317, %v318
        %v320 = vrot.slane %v319, 2
        %v321 = vadd.f32 %v319, %v320
        %v322 = vrot.slane %v321, 1
        %v323 = vadd.f32 %v321, %v322
        %s324 = vtos %v323
        %v325 = vstv %s324
        %v326 = vmul.f32 %v155, %v156
        %v328 = vperm.slane %v326, 0
        %v329 = vperm.slane %v326, 1
        %v332 = vsel %vm163, %v328, 0.0
        %v333 = vsel %vm163, %v329, 0.0
        %v334 = vadd.f32 %v332, %v333
        %335 = vadd.xlane.f32.xlu0 %v334
        %v336 = vpop.xlane.xlu0 %335
        %v337 = vrot.slane %v336, 4
        %v338 = vadd.f32 %v336, %v337
        %v339 = vrot.slane %v338, 2
        %v340 = vadd.f32 %v338, %v339
        %v341 = vrot.slane %v340, 1
        %v342 = vadd.f32 %v340, %v341
        %s343 = vtos %v342
        %v344 = vstv %s343
        %v345 = vmul.f32 %v155, %v157
        %v347 = vperm.slane %v345, 0
        %v348 = vperm.slane %v345, 1
        %v351 = vsel %vm163, %v347, 0.0
        %v352 = vsel %vm163, %v348, 0.0
        %v353 = vadd.f32 %v351, %v352
        %354 = vadd.xlane.f32.xlu0 %v353
        %v355 = vpop.xlane.xlu0 %354
        %v356 = vrot.slane %v355, 4
        %v357 = vadd.f32 %v355, %v356
        %v358 = vrot.slane %v357, 2
        %v359 = vadd.f32 %v357, %v358
        %v360 = vrot.slane %v359, 1
        %v361 = vadd.f32 %v359, %v360
        %s362 = vtos %v361
        %v363 = vstv %s362
        %v364 = vmul.f32 %v156, %v156
        %v366 = vperm.slane %v364, 0
        %v367 = vperm.slane %v364, 1
        %v370 = vsel %vm163, %v366, 0.0
        %v371 = vsel %vm163, %v367, 0.0
        %v372 = vadd.f32 %v370, %v371
        %373 = vadd.xlane.f32.xlu0 %v372
        %v374 = vpop.xlane.xlu0 %373
        %v375 = vrot.slane %v374, 4
        %v376 = vadd.f32 %v374, %v375
        %v377 = vrot.slane %v376, 2
        %v378 = vadd.f32 %v376, %v377
        %v379 = vrot.slane %v378, 1
        %v380 = vadd.f32 %v378, %v379
        %s381 = vtos %v380
        %v382 = vstv %s381
        %v383 = vmul.f32 %v156, %v157
        %v385 = vperm.slane %v383, 0
        %v386 = vperm.slane %v383, 1
        %v389 = vsel %vm163, %v385, 0.0
        %v390 = vsel %vm163, %v386, 0.0
        %v391 = vadd.f32 %v389, %v390
        %392 = vadd.xlane.f32.xlu0 %v391
        %v393 = vpop.xlane.xlu0 %392
        %v394 = vrot.slane %v393, 4
        %v395 = vadd.f32 %v393, %v394
        %v396 = vrot.slane %v395, 2
        %v397 = vadd.f32 %v395, %v396
        %v398 = vrot.slane %v397, 1
        %v399 = vadd.f32 %v397, %v398
        %s400 = vtos %v399
        %v401 = vstv %s400
        %v402 = vmul.f32 %v157, %v157
        %v404 = vperm.slane %v402, 0
        %v405 = vperm.slane %v402, 1
        %v408 = vsel %vm163, %v404, 0.0
        %v409 = vsel %vm163, %v405, 0.0
        %v410 = vadd.f32 %v408, %v409
        %411 = vadd.xlane.f32.xlu0 %v410
        %v412 = vpop.xlane.xlu0 %411
        %v413 = vrot.slane %v412, 4
        %v414 = vadd.f32 %v412, %v413
        %v415 = vrot.slane %v414, 2
        %v416 = vadd.f32 %v414, %v415
        %v417 = vrot.slane %v416, 1
        %v418 = vadd.f32 %v416, %v417
        %s419 = vtos %v418
        %v420 = vstv %s419
        %vm421 = vcmask 7168
        %v422 = vsel %vm421, %v176, %v194
        %vm423 = vcmask 15360
        %v424 = vsel %vm423, %v422, %v212
        %vm425 = vcmask 23552
        %v426 = vsel %vm425, %v424, %v230
        %vm427 = vcmask 31744
        %v428 = vsel %vm427, %v426, %v249
        %vm429 = vcmask 39936
        %v430 = vsel %vm429, %v428, %v268
        %vm431 = vcmask 48128
        %v432 = vsel %vm431, %v430, %v287
        %vm433 = vcmask 56320
        %v434 = vsel %vm433, %v432, %v306
        %vm435 = vcmask 64512
        %v436 = vsel %vm435, %v434, %v325
        %vm437 = vcmask 72704
        %v438 = vsel %vm437, %v436, %v344
        %vm439 = vcmask 80896
        %v440 = vsel %vm439, %v438, %v363
        %vm441 = vcmask 89088
        %v442 = vsel %vm441, %v440, %v382
        %vm443 = vcmask 97280
        %v444 = vsel %vm443, %v442, %v401
        %vm445 = vcmask 105472
        %v446 = vsel %vm445, %v444, %v420
        %vm447 = vcmask 106496
        %448 = vst.msk [vmem:[%s152] sm:$0x1] %vm447, %v446
        %s449 = sand.u32 %s68, 1
        %s450 = scalar_lea.sflag [#allocation4], %s449
        %s451 = sand.u32 %s68, 1
        %s452 = scalar_lea.vmem [#allocation5], %s451
        // Predicated region
        $region29: #{tpu_custom_call.1} parent=23 // pred_check
          %p453 = pneg %p78
        $region30: #{tpu_custom_call.1} parent=23 // pred_check_branch
          %455 = sbr.rel (%p453) target = $region32
        $region31: #{tpu_custom_call.1} parent=23 // pred_region
          %457 = vsyncadd %s450, 0
          %s458 = sadd.s32 %s23, %s22
          %s459 = scalar_lea.hbm %s1, %s458
          %s461 = sshll.u32 %s452, 4
          %s462 = int_to_ptr.vmem [resolvable:$true] %s461
          %s463 = sshll.u32 %s459, 4
          %s464 = int_to_ptr.hbm [resolvable:$true] %s463
          %466 = dma.vmem_to_hbm [thread:$0]  %s462, 16, %s464, %s450
        $region32: #{tpu_custom_call.1} parent=23 // pred_fallthru
          _
      $region24: #{tpu_custom_call.1} parent=5 // pred_fallthru
        _
      %p467 = scmp.le.s32.totalorder 2, %s13
      // Predicated region
      $region33: #{tpu_custom_call.1} parent=5 // pred_check
        %p468 = pneg %p467
      $region34: #{tpu_custom_call.1} parent=5 // pred_check_branch
        %470 = sbr.rel (%p468) target = $region36
      $region35: #{tpu_custom_call.1} parent=5 // pred_region
        %s471 = ssub.s32 %s13, 2
        // Predicated region
        $region37: #{tpu_custom_call.1} parent=35 // pred_check
          %p472 = pneg %p84
        $region38: #{tpu_custom_call.1} parent=35 // pred_check_branch
          %474 = sbr.rel (%p472) target = $region40
        $region39: #{tpu_custom_call.1} parent=35 // pred_region
          %s475 = sand.u32 %s69, 1
          %s476 = scalar_lea.sflag [#allocation4], %s475
          %s477 = sand.u32 %s69, 1
          %s478 = scalar_lea.vmem [#allocation5], %s477
          %480 = dma.done %s476, 16
        $region40: #{tpu_custom_call.1} parent=35 // pred_fallthru
          _
      $region36: #{tpu_custom_call.1} parent=5 // pred_fallthru
        _
    $region6: #{tpu_custom_call.1} parent=1 // loop_footer
      %s17 = sadd.s32 1, %s13
    $region7: #{tpu_custom_call.1} parent=1 // loop_footer_branch
      %12 = sbr.rel target = $region3
    $region8: #{tpu_custom_call.1} parent=1 // loop_exit
      _
    %481 = vsyncpa [#allocation3], 1
    %s482 = scalar_lea.sflag [#allocation3], 1
    %483 = vsyncpa %s482, 1
    %484 = vsyncpa [#allocation4], 1
    %s485 = scalar_lea.sflag [#allocation4], 1
    %486 = vsyncpa %s485, 1

</llo_original>
